<compile_context>
chip_gen: v7x
topology: tpu7x:2x2x1
jax: 0.10.0
libtpu: 0.0.40
codegen_flags: <defaults>
</compile_context>

<pallas_src>
import jax
import jax.numpy as jnp
from jax.experimental import pallas as pl
from jax.experimental.pallas import tpu as pltpu


def _pos_embed_kernel(lhs_ref, rhs_ref, out_ref):
    # lhs_ref: (2F, K)        block-diagonal [col_t | 0 ; 0 | row_t], VMEM resident
    # rhs_ref: (K, lane_tile) fused one-hot selection slab for this lane tile
    # out_ref: (2F, lane_tile) NCHW output slab with spatial axes flattened on lanes
    out_ref[...] = jnp.dot(
        lhs_ref[...], rhs_ref[...],
        preferred_element_type=jnp.float32,
        precision=jax.lax.Precision.HIGHEST,
    )


def position_embedding_learned(x, col_embed, row_embed):
    """x: [B, C, H, W]; col_embed/row_embed: [N, F] (N=50). Returns [B, 2F, H, W] f32."""
    B = int(x.shape[0])
    H, W = int(x.shape[-2]), int(x.shape[-1])
    N, F = col_embed.shape
    assert row_embed.shape == (N, F), (row_embed.shape, col_embed.shape)
    # nn.Embedding(50, F) raises on out-of-range indices; VMEM refs have no
    # runtime bounds check, so guard here instead of silently reading OOB.
    if H > N or W > N:
        raise ValueError(f"spatial dims ({H},{W}) exceed embedding table size {N}")

    HW = H * W
    # Lane tiling: pad HW to a multiple of 128 (lane-dense stores).  For large
    # maps use a few "parallel" lane tiles so v7x's two TCs split the stores.
    if HW >= 4096:
        num_tiles = 4
    elif HW >= 2048:
        num_tiles = 2
    else:
        num_tiles = 1
    lane_tile = pl.cdiv(HW, num_tiles * 128) * 128
    HW_pad = lane_tile * num_tiles

    f32 = jnp.float32
    col_t = jnp.asarray(col_embed, f32)[:W].T            # (F, W)
    row_t = jnp.asarray(row_embed, f32)[:H].T             # (F, H)

    # lhs = blockdiag(col_t, row_t): (2F, W+H)
    lhs = jnp.concatenate(
        [jnp.concatenate([col_t, jnp.zeros((F, H), f32)], axis=1),
         jnp.concatenate([jnp.zeros((F, W), f32), row_t], axis=1)],
        axis=0)

    # rhs: fused exact 0/1 selection matrix, (W+H, HW_pad).
    # Column k (< HW) picks j = k % W in the top W rows and i = k // W in the
    # bottom H rows; padded columns (k >= HW) are all-zero.
    k = jnp.arange(HW_pad, dtype=jnp.int32)                # (HW_pad,)
    valid = (k < HW)[None, :]
    col_sel = ((k % W)[None, :] == jnp.arange(W, dtype=jnp.int32)[:, None]) & valid
    row_sel = ((k // W)[None, :] == jnp.arange(H, dtype=jnp.int32)[:, None]) & valid
    rhs = jnp.concatenate([col_sel, row_sel], axis=0).astype(f32)   # (W+H, HW_pad)

    K = W + H
    pos_flat = pl.pallas_call(
        _pos_embed_kernel,
        out_shape=jax.ShapeDtypeStruct((2 * F, HW_pad), f32),
        grid=(num_tiles,),
        in_specs=[
            pl.BlockSpec((2 * F, K), lambda t: (0, 0)),        # resident, fetched once
            pl.BlockSpec((K, lane_tile), lambda t: (0, t)),
        ],
        out_specs=pl.BlockSpec((2 * F, lane_tile), lambda t: (0, t)),
        compiler_params=pltpu.CompilerParams(
            dimension_semantics=("parallel",)),                # v7x: both TCs split lanes
    )(lhs, rhs)

    # Drop lane padding (free slice), contiguous reshape to (2F, H, W), and
    # broadcast the batch dimension in the wrapper so XLA can fuse it into
    # whatever consumes the positional encoding.
    pos = pos_flat[:, :HW].reshape(2 * F, H, W)
    return jnp.broadcast_to(pos[None], (B, 2 * F, H, W))


def _reference(x, col_embed, row_embed):
    """Pure-JAX reference of the PyTorch forward."""
    B = x.shape[0]
    H, W = x.shape[-2], x.shape[-1]
    x_emb = col_embed[:W]                                  # (W, F)
    y_emb = row_embed[:H]                                  # (H, F)
    pos = jnp.concatenate(
        [jnp.broadcast_to(x_emb[None, :, :], (H, W, x_emb.shape[-1])),
         jnp.broadcast_to(y_emb[:, None, :], (H, W, y_emb.shape[-1]))],
        axis=-1)                                           # (H, W, 2F)
    pos = jnp.transpose(pos, (2, 0, 1))[None]              # (1, 2F, H, W)
    return jnp.broadcast_to(pos, (B,) + pos.shape[1:])


if __name__ == "__main__":
    B, C, H, W = 2, 4, 16, 16
    num_pos_feats = 32  # small, analogous to the default 256

    key = jax.random.PRNGKey(0)
    k_x, k_row, k_col = jax.random.split(key, 3)

    # nn.init.uniform_ -> U[0, 1)
    row_embed = jax.random.uniform(k_row, (50, num_pos_feats), dtype=jnp.float32)
    col_embed = jax.random.uniform(k_col, (50, num_pos_feats), dtype=jnp.float32)
    x = jax.random.normal(k_x, (B, C, H, W), dtype=jnp.float32)

    pos = position_embedding_learned(x, col_embed, row_embed)
    pos = jax.block_until_ready(pos)

    ref = _reference(x, col_embed, row_embed)
    assert pos.shape == (B, 2 * num_pos_feats, H, W), pos.shape
    assert jnp.allclose(pos, ref), "mismatch vs reference"

    print("KERNEL_OK")
</pallas_src>

<mosaic_0001>
module attributes {stable_mosaic.version = 11 : i64} {
  func.func @_pos_embed_kernel(%arg0: i32, %arg1: memref<64x32xf32, #tpu.memory_space<vmem>>, %arg2: memref<32x256xf32, #tpu.memory_space<vmem>>, %arg3: memref<64x256xf32, #tpu.memory_space<vmem>>) attributes {dimension_semantics = [#tpu.dimension_semantics<parallel>], iteration_bounds = array<i64: 1>, scalar_prefetch = 0 : i64, scratch_operands = 0 : i64, tpu.core_type = #tpu.core_type<tc>, window_params = [{pipeline_mode = #tpu.pipeline_mode<synchronous>, transform_indices = @transform_0, window_bounds = array<i64: 64, 32>}, {transform_indices = @transform_1, window_bounds = array<i64: 32, 256>}, {transform_indices = @transform_2, window_bounds = array<i64: 64, 256>}]} {
    %c0 = arith.constant 0 : index
    %c0_0 = arith.constant 0 : index
    %0 = vector.load %arg1[%c0, %c0_0] : memref<64x32xf32, #tpu.memory_space<vmem>>, vector<64x32xf32>
    %c0_1 = arith.constant 0 : index
    %c0_2 = arith.constant 0 : index
    %1 = vector.load %arg2[%c0_1, %c0_2] : memref<32x256xf32, #tpu.memory_space<vmem>>, vector<32x256xf32>
    %cst = arith.constant dense<0.000000e+00> : vector<64x256xf32>
    %2 = tpu.matmul %0, %1, %cst {dimension_numbers = #tpu.dot_dimension_numbers<[1], [0], [0], [1], [0, 0, 1, 1], [], []>, precision = #tpu.contract_precision<fp32>} : vector<64x32xf32>, vector<32x256xf32>, vector<64x256xf32> -> vector<64x256xf32>
    %c0_3 = arith.constant 0 : index
    %c0_4 = arith.constant 0 : index
    %3 = vector.load %arg3[%c0_3, %c0_4] : memref<64x256xf32, #tpu.memory_space<vmem>>, vector<64x256xf32>
    tpu.vector_store %arg3[%c0_3, %c0_4], %2 {strides = array<i32>} : memref<64x256xf32, #tpu.memory_space<vmem>>, vector<64x256xf32>,
    return
  }
  func.func @transform_0(%arg0: i32) -> (i32, i32) {
    %c0_i32 = arith.constant 0 : i32
    %c0_i32_0 = arith.constant 0 : i32
    %c0_i32_1 = arith.constant 0 : i32
    return %c0_i32, %c0_i32_0 : i32, i32
  }
  func.func @transform_1(%arg0: i32) -> (i32, i32) {
    %c0_i32 = arith.constant 0 : i32
    %c0_i32_0 = arith.constant 0 : i32
    return %c0_i32, %arg0 : i32, i32
  }
  func.func @transform_2(%arg0: i32) -> (i32, i32) {
    %c0_i32 = arith.constant 0 : i32
    %c0_i32_0 = arith.constant 0 : i32
    return %c0_i32, %arg0 : i32, i32
  }
}

</mosaic_0001>

<llo_original>
// kernel: tpu_custom_call.1
$region0: #{tpu_custom_call.1}
  #allocation0 [shape = 'u32[]', space=smem, size = 0x4, offset = 0x4, fixed_abs, tag = 'smem constant byte address 0x4 - core index']
  #allocation1 [shape = 'u32[144,128]{1,0:T(1,128)}', space=vmem, size = 0x12000, scoped, tag = 'internal scratch']
  %s0 = inlined_call_operand.vmem [shape: f32[64,32], index: 0, kind: input, shape index: {}]
  %s1 = inlined_call_operand.vmem [shape: f32[32,256], index: 1, kind: input, shape index: {}]
  %s2 = inlined_call_operand.hbm [shape: f32[64,256], index: 2, kind: output, shape index: {}]
  %s3 = sld [smem:[#allocation0]]
  $region18: #{tpu_custom_call.1} parent=0
    _
  %s5 = ssub.s32 1, %s3
  %s6 = scalar_select 0, %s5, %s3
  $region1: #{tpu_custom_call.1} parent=0
    #allocation2 [shape = 'u8[65536]{0}', space=vmem, size = 0x10000, scoped, tag = 'output window, operand 0, single buffered']
    #allocation3 [shape = 's32[1]{0}', space=sflag, size = 0x4, scoped, tag = 'scoped memory for tpu_custom_call.1']
    %7 = vsyncpa [#allocation3], 0
    // Predicated region
    $region2: #{tpu_custom_call.1} parent=1 // pred_check
      _
    $region3: #{tpu_custom_call.1} parent=1 // pred_check_branch
      %9 = sbr.rel (0) target = $region5
    $region4: #{tpu_custom_call.1} parent=1 // pred_region
      _
    $region5: #{tpu_custom_call.1} parent=1 // pred_fallthru
      _
    // Predicated region
    $region6: #{tpu_custom_call.1} parent=1 // pred_check
      _
    $region7: #{tpu_custom_call.1} parent=1 // pred_check_branch
      %11 = sbr.rel (0) target = $region9
    $region8: #{tpu_custom_call.1} parent=1 // pred_region
      _
    $region9: #{tpu_custom_call.1} parent=1 // pred_fallthru
      _
    %v12 = vld [vmem:[%s0] sm:$0xff]
    %v13 = vld [vmem:[%s0 + $0x8] sm:$0xff]
    %v14 = vld [vmem:[%s0 + $0x10] sm:$0xff]
    %v15 = vld [vmem:[%s0 + $0x18] sm:$0xff]
    %v16 = vld [vmem:[%s0 + $0x20] sm:$0xff]
    %v17 = vld [vmem:[%s0 + $0x28] sm:$0xff]
    %v18 = vld [vmem:[%s0 + $0x30] sm:$0xff]
    %v19 = vld [vmem:[%s0 + $0x38] sm:$0xff]
    %v20 = vld [vmem:[%s1] sm:$0xff]
    %v21 = vld [vmem:[%s1 + $0x8] sm:$0xff]
    %v22 = vld [vmem:[%s1 + $0x10] sm:$0xff]
    %v23 = vld [vmem:[%s1 + $0x18] sm:$0xff]
    %v24 = vld [vmem:[%s1 + $0x20] sm:$0xff]
    %v25 = vld [vmem:[%s1 + $0x28] sm:$0xff]
    %v26 = vld [vmem:[%s1 + $0x30] sm:$0xff]
    %v27 = vld [vmem:[%s1 + $0x38] sm:$0xff]
    %vm28 = vcmask 261120
    %v30 = vsel %vm28, %v12, 0
    %v33 = vsel %vm28, %v13, 0
    %v36 = vsel %vm28, %v14, 0
    %v39 = vsel %vm28, %v15, 0
    %v42 = vsel %vm28, %v16, 0
    %v45 = vsel %vm28, %v17, 0
    %v48 = vsel %vm28, %v18, 0
    %v51 = vsel %vm28, %v19, 0
    %v53 = vand.u32 %v21, 4294901760
    %54 = vmatprep.subr.mxu0 %v53
    %v55 = vand.u32 %v20, 4294901760
    %56 = vmatpush1.msra.mxu0 %v55
    %v57 = vand.u32 %v23, 4294901760
    %58 = vmatprep.subr.mxu0 %v57
    %v59 = vand.u32 %v22, 4294901760
    %60 = vmatpush1.msra.mxu0 %v59
    %v61 = vand.u32 %v25, 4294901760
    %62 = vmatprep.subr.mxu0 %v61
    %v63 = vand.u32 %v24, 4294901760
    %64 = vmatpush1.msra.mxu0 %v63
    %v65 = vand.u32 %v27, 4294901760
    %66 = vmatprep.subr.mxu0 %v65
    %v67 = vand.u32 %v26, 4294901760
    %68 = vmatpush1.msra.mxu0 %v67
    %69 = vmatprep.subr.mxu0 0.0
    %70 = vmatpush1.msra.mxu0 0.0
    %71 = vmatprep.subr.mxu0 0.0
    %72 = vmatpush1.msra.mxu0 0.0
    %73 = vmatprep.subr.mxu0 0.0
    %74 = vmatpush1.msra.mxu0 0.0
    %75 = vmatprep.subr.mxu0 0.0
    %76 = vmatpush1.msra.mxu0 0.0
    %77 = vmatprep.subr.mxu0 0.0
    %78 = vmatpush1.msra.mxu0 0.0
    %79 = vmatprep.subr.mxu0 0.0
    %80 = vmatpush1.msra.mxu0 0.0
    %81 = vmatprep.subr.mxu0 0.0
    %82 = vmatpush1.msra.mxu0 0.0
    %83 = vmatprep.subr.mxu0 0.0
    %84 = vmatpush1.msra.mxu0 0.0
    %85 = vmatprep.subr.mxu0 0.0
    %86 = vmatpush1.msra.mxu0 0.0
    %87 = vmatprep.subr.mxu0 0.0
    %88 = vmatpush1.msra.mxu0 0.0
    %89 = vmatprep.subr.mxu0 0.0
    %90 = vmatpush1.msra.mxu0 0.0
    %91 = vmatprep.subr.mxu0 0.0
    %92 = vmatpush1.msra.mxu0 0.0
    %93 = vmatprep.subr.mxu0 0.0
    %94 = vmatpush1.msra.mxu0 0.0
    %95 = vmatprep.subr.mxu0 0.0
    %96 = vmatpush1.msra.mxu0 0.0
    %97 = vmatprep.subr.mxu0 0.0
    %98 = vmatpush1.msra.mxu0 0.0
    %99 = vmatprep.subr.mxu0 0.0
    %100 = vmatpush1.msra.mxu0 0.0
    %101 = vmatprep.subr.mxu0 0.0
    %102 = vmatpush1.msra.mxu0 0.0
    %103 = vmatprep.subr.mxu0 0.0
    %104 = vmatpush1.msra.mxu0 0.0
    %105 = vmatprep.subr.mxu0 0.0
    %106 = vmatpush1.msra.mxu0 0.0
    %107 = vmatprep.subr.mxu0 0.0
    %108 = vmatpush1.msra.mxu0 0.0
    %109 = vmatprep.subr.mxu0 0.0
    %110 = vmatpush1.msra.mxu0 0.0
    %111 = vmatprep.subr.mxu0 0.0
    %112 = vmatpush1.msra.mxu0 0.0
    %113 = vmatprep.subr.mxu0 0.0
    %114 = vmatpush1.msra.mxu0 0.0
    %115 = vmatprep.subr.mxu0 0.0
    %116 = vmatpush1.msra.mxu0 0.0
    %117 = vmatprep.subr.mxu0 0.0
    %118 = vmatpush1.msra.mxu0 0.0
    %119 = vmatprep.subr.mxu0 0.0
    %120 = vmatpush1.msra.mxu0 0.0
    %121 = vmatprep.subr.mxu0 0.0
    %122 = vmatpush1.msra.mxu0 0.0
    %123 = vmatprep.subr.mxu0 0.0
    %124 = vmatpush1.msra.mxu0 0.0
    %125 = vmatprep.mubr.f32.mxu0 0.0
    %v126 = vand.u32 %v30, 4294901760
    %v127 = vsub.f32 %v30, %v126
    %v128 = vand.u32 %v127, 4294901760
    %v129 = vsub.f32 %v127, %v128
    %v130 = vand.u32 %v129, 4294901760
    %131 = vmatmul.mubr.f32.gmra.mrb[0].mxu0 %v130
    %v132 = vpop.f32.mrb[0].mxu0
    %v133 = vadd.f32 0.0, %v132
    %v134 = vpop.f32.mrb[0].mxu0
    %v135 = vadd.f32 0.0, %v134
    %136 = vmatprep.mubr.f32.mxu0 0.0
    %v137 = vand.u32 %v33, 4294901760
    %v138 = vsub.f32 %v33, %v137
    %v139 = vand.u32 %v138, 4294901760
    %v140 = vsub.f32 %v138, %v139
    %v141 = vand.u32 %v140, 4294901760
    %142 = vmatmul.mubr.f32.gmra.mrb[0].mxu0 %v141
    %v143 = vpop.f32.mrb[0].mxu0
    %v144 = vadd.f32 0.0, %v143
    %v145 = vpop.f32.mrb[0].mxu0
    %v146 = vadd.f32 0.0, %v145
    %147 = vmatprep.mubr.f32.mxu0 0.0
    %v148 = vand.u32 %v36, 4294901760
    %v149 = vsub.f32 %v36, %v148
    %v150 = vand.u32 %v149, 4294901760
    %v151 = vsub.f32 %v149, %v150
    %v152 = vand.u32 %v151, 4294901760
    %153 = vmatmul.mubr.f32.gmra.mrb[0].mxu0 %v152
    %v154 = vpop.f32.mrb[0].mxu0
    %v155 = vadd.f32 0.0, %v154
    %v156 = vpop.f32.mrb[0].mxu0
    %v157 = vadd.f32 0.0, %v156
    %158 = vmatprep.mubr.f32.mxu0 0.0
    %v159 = vand.u32 %v39, 4294901760
    %v160 = vsub.f32 %v39, %v159
    %v161 = vand.u32 %v160, 4294901760
    %v162 = vsub.f32 %v160, %v161
    %v163 = vand.u32 %v162, 4294901760
    %164 = vmatmul.mubr.f32.gmra.mrb[0].mxu0 %v163
    %v165 = vpop.f32.mrb[0].mxu0
    %v166 = vadd.f32 0.0, %v165
    %v167 = vpop.f32.mrb[0].mxu0
    %v168 = vadd.f32 0.0, %v167
    %169 = vmatprep.mubr.f32.mxu0 0.0
    %v170 = vand.u32 %v42, 4294901760
    %v171 = vsub.f32 %v42, %v170
    %v172 = vand.u32 %v171, 4294901760
    %v173 = vsub.f32 %v171, %v172
    %v174 = vand.u32 %v173, 4294901760
    %175 = vmatmul.mubr.f32.gmra.mrb[0].mxu0 %v174
    %v176 = vpop.f32.mrb[0].mxu0
    %v177 = vadd.f32 0.0, %v176
    %v178 = vpop.f32.mrb[0].mxu0
    %v179 = vadd.f32 0.0, %v178
    %180 = vmatprep.mubr.f32.mxu0 0.0
    %v181 = vand.u32 %v45, 4294901760
    %v182 = vsub.f32 %v45, %v181
    %v183 = vand.u32 %v182, 4294901760
    %v184 = vsub.f32 %v182, %v183
    %v185 = vand.u32 %v184, 4294901760
    %186 = vmatmul.mubr.f32.gmra.mrb[0].mxu0 %v185
    %v187 = vpop.f32.mrb[0].mxu0
    %v188 = vadd.f32 0.0, %v187
    %v189 = vpop.f32.mrb[0].mxu0
    %v190 = vadd.f32 0.0, %v189
    %191 = vmatprep.mubr.f32.mxu0 0.0
    %v192 = vand.u32 %v48, 4294901760
    %v193 = vsub.f32 %v48, %v192
    %v194 = vand.u32 %v193, 4294901760
    %v195 = vsub.f32 %v193, %v194
    %v196 = vand.u32 %v195, 4294901760
    %197 = vmatmul.mubr.f32.gmra.mrb[0].mxu0 %v196
    %v198 = vpop.f32.mrb[0].mxu0
    %v199 = vadd.f32 0.0, %v198
    %v200 = vpop.f32.mrb[0].mxu0
    %v201 = vadd.f32 0.0, %v200
    %202 = vmatprep.mubr.f32.mxu0 0.0
    %v203 = vand.u32 %v51, 4294901760
    %v204 = vsub.f32 %v51, %v203
    %v205 = vand.u32 %v204, 4294901760
    %v206 = vsub.f32 %v204, %v205
    %v207 = vand.u32 %v206, 4294901760
    %208 = vmatmul.mubr.f32.gmra.mrb[0].mxu0 %v207
    %v209 = vpop.f32.mrb[0].mxu0
    %v210 = vadd.f32 0.0, %v209
    %v211 = vpop.f32.mrb[0].mxu0
    %v212 = vadd.f32 0.0, %v211
    %213 = vdwg.mxu0
    %v214 = vand.u32 %v21, 4294901760
    %v215 = vsub.f32 %v21, %v214
    %v216 = vand.u32 %v215, 4294901760
    %v217 = vsub.f32 %v215, %v216
    %v218 = vand.u32 %v217, 4294901760
    %219 = vmatprep.subr.mxu0 %v218
    %v220 = vand.u32 %v20, 4294901760
    %v221 = vsub.f32 %v20, %v220
    %v222 = vand.u32 %v221, 4294901760
    %v223 = vsub.f32 %v221, %v222
    %v224 = vand.u32 %v223, 4294901760
    %225 = vmatpush1.msra.mxu0 %v224
    %v226 = vand.u32 %v23, 4294901760
    %v227 = vsub.f32 %v23, %v226
    %v228 = vand.u32 %v227, 4294901760
    %v229 = vsub.f32 %v227, %v228
    %v230 = vand.u32 %v229, 4294901760
    %231 = vmatprep.subr.mxu0 %v230
    %v232 = vand.u32 %v22, 4294901760
    %v233 = vsub.f32 %v22, %v232
    %v234 = vand.u32 %v233, 4294901760
    %v235 = vsub.f32 %v233, %v234
    %v236 = vand.u32 %v235, 4294901760
    %237 = vmatpush1.msra.mxu0 %v236
    %v238 = vand.u32 %v25, 4294901760
    %v239 = vsub.f32 %v25, %v238
    %v240 = vand.u32 %v239, 4294901760
    %v241 = vsub.f32 %v239, %v240
    %v242 = vand.u32 %v241, 4294901760
    %243 = vmatprep.subr.mxu0 %v242
    %v244 = vand.u32 %v24, 4294901760
    %v245 = vsub.f32 %v24, %v244
    %v246 = vand.u32 %v245, 4294901760
    %v247 = vsub.f32 %v245, %v246
    %v248 = vand.u32 %v247, 4294901760
    %249 = vmatpush1.msra.mxu0 %v248
    %v250 = vand.u32 %v27, 4294901760
    %v251 = vsub.f32 %v27, %v250
    %v252 = vand.u32 %v251, 4294901760
    %v253 = vsub.f32 %v251, %v252
    %v254 = vand.u32 %v253, 4294901760
    %255 = vmatprep.subr.mxu0 %v254
    %v256 = vand.u32 %v26, 4294901760
    %v257 = vsub.f32 %v26, %v256
    %v258 = vand.u32 %v257, 4294901760
    %v259 = vsub.f32 %v257, %v258
    %v260 = vand.u32 %v259, 4294901760
    %261 = vmatpush1.msra.mxu0 %v260
    %262 = vmatprep.subr.mxu0 0.0
    %263 = vmatpush1.msra.mxu0 0.0
    %264 = vmatprep.subr.mxu0 0.0
    %265 = vmatpush1.msra.mxu0 0.0
    %266 = vmatprep.subr.mxu0 0.0
    %267 = vmatpush1.msra.mxu0 0.0
    %268 = vmatprep.subr.mxu0 0.0
    %269 = vmatpush1.msra.mxu0 0.0
    %270 = vmatprep.subr.mxu0 0.0
    %271 = vmatpush1.msra.mxu0 0.0
    %272 = vmatprep.subr.mxu0 0.0
    %273 = vmatpush1.msra.mxu0 0.0
    %274 = vmatprep.subr.mxu0 0.0
    %275 = vmatpush1.msra.mxu0 0.0
    %276 = vmatprep.subr.mxu0 0.0
    %277 = vmatpush1.msra.mxu0 0.0
    %278 = vmatprep.subr.mxu0 0.0
    %279 = vmatpush1.msra.mxu0 0.0
    %280 = vmatprep.subr.mxu0 0.0
    %281 = vmatpush1.msra.mxu0 0.0
    %282 = vmatprep.subr.mxu0 0.0
    %283 = vmatpush1.msra.mxu0 0.0
    %284 = vmatprep.subr.mxu0 0.0
    %285 = vmatpush1.msra.mxu0 0.0
    %286 = vmatprep.subr.mxu0 0.0
    %287 = vmatpush1.msra.mxu0 0.0
    %288 = vmatprep.subr.mxu0 0.0
    %289 = vmatpush1.msra.mxu0 0.0
    %290 = vmatprep.subr.mxu0 0.0
    %291 = vmatpush1.msra.mxu0 0.0
    %292 = vmatprep.subr.mxu0 0.0
    %293 = vmatpush1.msra.mxu0 0.0
    %294 = vmatprep.subr.mxu0 0.0
    %295 = vmatpush1.msra.mxu0 0.0
    %296 = vmatprep.subr.mxu0 0.0
    %297 = vmatpush1.msra.mxu0 0.0
    %298 = vmatprep.subr.mxu0 0.0
    %299 = vmatpush1.msra.mxu0 0.0
    %300 = vmatprep.subr.mxu0 0.0
    %301 = vmatpush1.msra.mxu0 0.0
    %302 = vmatprep.subr.mxu0 0.0
    %303 = vmatpush1.msra.mxu0 0.0
    %304 = vmatprep.subr.mxu0 0.0
    %305 = vmatpush1.msra.mxu0 0.0
    %306 = vmatprep.subr.mxu0 0.0
    %307 = vmatpush1.msra.mxu0 0.0
    %308 = vmatprep.subr.mxu0 0.0
    %309 = vmatpush1.msra.mxu0 0.0
    %310 = vmatprep.subr.mxu0 0.0
    %311 = vmatpush1.msra.mxu0 0.0
    %312 = vmatprep.subr.mxu0 0.0
    %313 = vmatpush1.msra.mxu0 0.0
    %314 = vmatprep.subr.mxu0 0.0
    %315 = vmatpush1.msra.mxu0 0.0
    %316 = vmatprep.subr.mxu0 0.0
    %317 = vmatpush1.msra.mxu0 0.0
    %318 = vmatprep.mubr.f32.mxu0 0.0
    %v319 = vand.u32 %v30, 4294901760
    %320 = vmatmul.mubr.f32.gmra.mrb[0].mxu0 %v319
    %v321 = vpop.f32.mrb[0].mxu0
    %v322 = vadd.f32 %v133, %v321
    %v323 = vpop.f32.mrb[0].mxu0
    %v324 = vadd.f32 %v135, %v323
    %325 = vmatprep.mubr.f32.mxu0 0.0
    %v326 = vand.u32 %v33, 4294901760
    %327 = vmatmul.mubr.f32.gmra.mrb[0].mxu0 %v326
    %v328 = vpop.f32.mrb[0].mxu0
    %v329 = vadd.f32 %v144, %v328
    %v330 = vpop.f32.mrb[0].mxu0
    %v331 = vadd.f32 %v146, %v330
    %332 = vmatprep.mubr.f32.mxu0 0.0
    %v333 = vand.u32 %v36, 4294901760
    %334 = vmatmul.mubr.f32.gmra.mrb[0].mxu0 %v333
    %v335 = vpop.f32.mrb[0].mxu0
    %v336 = vadd.f32 %v155, %v335
    %v337 = vpop.f32.mrb[0].mxu0
    %v338 = vadd.f32 %v157, %v337
    %339 = vmatprep.mubr.f32.mxu0 0.0
    %v340 = vand.u32 %v39, 4294901760
    %341 = vmatmul.mubr.f32.gmra.mrb[0].mxu0 %v340
    %v342 = vpop.f32.mrb[0].mxu0
    %v343 = vadd.f32 %v166, %v342
    %v344 = vpop.f32.mrb[0].mxu0
    %v345 = vadd.f32 %v168, %v344
    %346 = vmatprep.mubr.f32.mxu0 0.0
    %v347 = vand.u32 %v42, 4294901760
    %348 = vmatmul.mubr.f32.gmra.mrb[0].mxu0 %v347
    %v349 = vpop.f32.mrb[0].mxu0
    %v350 = vadd.f32 %v177, %v349
    %v351 = vpop.f32.mrb[0].mxu0
    %v352 = vadd.f32 %v179, %v351
    %353 = vmatprep.mubr.f32.mxu0 0.0
    %v354 = vand.u32 %v45, 4294901760
    %355 = vmatmul.mubr.f32.gmra.mrb[0].mxu0 %v354
    %v356 = vpop.f32.mrb[0].mxu0
    %v357 = vadd.f32 %v188, %v356
    %v358 = vpop.f32.mrb[0].mxu0
    %v359 = vadd.f32 %v190, %v358
    %360 = vmatprep.mubr.f32.mxu0 0.0
    %v361 = vand.u32 %v48, 4294901760
    %362 = vmatmul.mubr.f32.gmra.mrb[0].mxu0 %v361
    %v363 = vpop.f32.mrb[0].mxu0
    %v364 = vadd.f32 %v199, %v363
    %v365 = vpop.f32.mrb[0].mxu0
    %v366 = vadd.f32 %v201, %v365
    %367 = vmatprep.mubr.f32.mxu0 0.0
    %v368 = vand.u32 %v51, 4294901760
    %369 = vmatmul.mubr.f32.gmra.mrb[0].mxu0 %v368
    %v370 = vpop.f32.mrb[0].mxu0
    %v371 = vadd.f32 %v210, %v370
    %v372 = vpop.f32.mrb[0].mxu0
    %v373 = vadd.f32 %v212, %v372
    %374 = vdwg.mxu0
    %v375 = vand.u32 %v21, 4294901760
    %v376 = vsub.f32 %v21, %v375
    %377 = vmatprep.subr.mxu0 %v376
    %v378 = vand.u32 %v20, 4294901760
    %v379 = vsub.f32 %v20, %v378
    %380 = vmatpush1.msra.mxu0 %v379
    %v381 = vand.u32 %v23, 4294901760
    %v382 = vsub.f32 %v23, %v381
    %383 = vmatprep.subr.mxu0 %v382
    %v384 = vand.u32 %v22, 4294901760
    %v385 = vsub.f32 %v22, %v384
    %386 = vmatpush1.msra.mxu0 %v385
    %v387 = vand.u32 %v25, 4294901760
    %v388 = vsub.f32 %v25, %v387
    %389 = vmatprep.subr.mxu0 %v388
    %v390 = vand.u32 %v24, 4294901760
    %v391 = vsub.f32 %v24, %v390
    %392 = vmatpush1.msra.mxu0 %v391
    %v393 = vand.u32 %v27, 4294901760
    %v394 = vsub.f32 %v27, %v393
    %395 = vmatprep.subr.mxu0 %v394
    %v396 = vand.u32 %v26, 4294901760
    %v397 = vsub.f32 %v26, %v396
    %398 = vmatpush1.msra.mxu0 %v397
    %399 = vmatprep.subr.mxu0 0.0
    %400 = vmatpush1.msra.mxu0 0.0
    %401 = vmatprep.subr.mxu0 0.0
    %402 = vmatpush1.msra.mxu0 0.0
    %403 = vmatprep.subr.mxu0 0.0
    %404 = vmatpush1.msra.mxu0 0.0
    %405 = vmatprep.subr.mxu0 0.0
    %406 = vmatpush1.msra.mxu0 0.0
    %407 = vmatprep.subr.mxu0 0.0
    %408 = vmatpush1.msra.mxu0 0.0
    %409 = vmatprep.subr.mxu0 0.0
    %410 = vmatpush1.msra.mxu0 0.0
    %411 = vmatprep.subr.mxu0 0.0
    %412 = vmatpush1.msra.mxu0 0.0
    %413 = vmatprep.subr.mxu0 0.0
    %414 = vmatpush1.msra.mxu0 0.0
    %415 = vmatprep.subr.mxu0 0.0
    %416 = vmatpush1.msra.mxu0 0.0
    %417 = vmatprep.subr.mxu0 0.0
    %418 = vmatpush1.msra.mxu0 0.0
    %419 = vmatprep.subr.mxu0 0.0
    %420 = vmatpush1.msra.mxu0 0.0
    %421 = vmatprep.subr.mxu0 0.0
    %422 = vmatpush1.msra.mxu0 0.0
    %423 = vmatprep.subr.mxu0 0.0
    %424 = vmatpush1.msra.mxu0 0.0
    %425 = vmatprep.subr.mxu0 0.0
    %426 = vmatpush1.msra.mxu0 0.0
    %427 = vmatprep.subr.mxu0 0.0
    %428 = vmatpush1.msra.mxu0 0.0
    %429 = vmatprep.subr.mxu0 0.0
    %430 = vmatpush1.msra.mxu0 0.0
    %431 = vmatprep.subr.mxu0 0.0
    %432 = vmatpush1.msra.mxu0 0.0
    %433 = vmatprep.subr.mxu0 0.0
    %434 = vmatpush1.msra.mxu0 0.0
    %435 = vmatprep.subr.mxu0 0.0
    %436 = vmatpush1.msra.mxu0 0.0
    %437 = vmatprep.subr.mxu0 0.0
    %438 = vmatpush1.msra.mxu0 0.0
    %439 = vmatprep.subr.mxu0 0.0
    %440 = vmatpush1.msra.mxu0 0.0
    %441 = vmatprep.subr.mxu0 0.0
    %442 = vmatpush1.msra.mxu0 0.0
    %443 = vmatprep.subr.mxu0 0.0
    %444 = vmatpush1.msra.mxu0 0.0
    %445 = vmatprep.subr.mxu0 0.0
    %446 = vmatpush1.msra.mxu0 0.0
    %447 = vmatprep.subr.mxu0 0.0
    %448 = vmatpush1.msra.mxu0 0.0
    %449 = vmatprep.subr.mxu0 0.0
    %450 = vmatpush1.msra.mxu0 0.0
    %451 = vmatprep.subr.mxu0 0.0
    %452 = vmatpush1.msra.mxu0 0.0
    %453 = vmatprep.subr.mxu0 0.0
    %454 = vmatpush1.msra.mxu0 0.0
    %455 = vmatprep.mubr.f32.mxu0 0.0
    %v456 = vand.u32 %v30, 4294901760
    %v457 = vsub.f32 %v30, %v456
    %458 = vmatmul.mubr.f32.gmra.mrb[0].mxu0 %v457
    %v459 = vpop.f32.mrb[0].mxu0
    %v460 = vadd.f32 %v322, %v459
    %v461 = vpop.f32.mrb[0].mxu0
    %v462 = vadd.f32 %v324, %v461
    %463 = vmatprep.mubr.f32.mxu0 0.0
    %v464 = vand.u32 %v33, 4294901760
    %v465 = vsub.f32 %v33, %v464
    %466 = vmatmul.mubr.f32.gmra.mrb[0].mxu0 %v465
    %v467 = vpop.f32.mrb[0].mxu0
    %v468 = vadd.f32 %v329, %v467
    %v469 = vpop.f32.mrb[0].mxu0
    %v470 = vadd.f32 %v331, %v469
    %471 = vmatprep.mubr.f32.mxu0 0.0
    %v472 = vand.u32 %v36, 4294901760
    %v473 = vsub.f32 %v36, %v472
    %474 = vmatmul.mubr.f32.gmra.mrb[0].mxu0 %v473
    %v475 = vpop.f32.mrb[0].mxu0
    %v476 = vadd.f32 %v336, %v475
    %v477 = vpop.f32.mrb[0].mxu0
    %v478 = vadd.f32 %v338, %v477
    %479 = vmatprep.mubr.f32.mxu0 0.0
    %v480 = vand.u32 %v39, 4294901760
    %v481 = vsub.f32 %v39, %v480
    %482 = vmatmul.mubr.f32.gmra.mrb[0].mxu0 %v481
    %v483 = vpop.f32.mrb[0].mxu0
    %v484 = vadd.f32 %v343, %v483
    %v485 = vpop.f32.mrb[0].mxu0
    %v486 = vadd.f32 %v345, %v485
    %487 = vmatprep.mubr.f32.mxu0 0.0
    %v488 = vand.u32 %v42, 4294901760
    %v489 = vsub.f32 %v42, %v488
    %490 = vmatmul.mubr.f32.gmra.mrb[0].mxu0 %v489
    %v491 = vpop.f32.mrb[0].mxu0
    %v492 = vadd.f32 %v350, %v491
    %v493 = vpop.f32.mrb[0].mxu0
    %v494 = vadd.f32 %v352, %v493
    %495 = vmatprep.mubr.f32.mxu0 0.0
    %v496 = vand.u32 %v45, 4294901760
    %v497 = vsub.f32 %v45, %v496
    %498 = vmatmul.mubr.f32.gmra.mrb[0].mxu0 %v497
    %v499 = vpop.f32.mrb[0].mxu0
    %v500 = vadd.f32 %v357, %v499
    %v501 = vpop.f32.mrb[0].mxu0
    %v502 = vadd.f32 %v359, %v501
    %503 = vmatprep.mubr.f32.mxu0 0.0
    %v504 = vand.u32 %v48, 4294901760
    %v505 = vsub.f32 %v48, %v504
    %506 = vmatmul.mubr.f32.gmra.mrb[0].mxu0 %v505
    %v507 = vpop.f32.mrb[0].mxu0
    %v508 = vadd.f32 %v364, %v507
    %v509 = vpop.f32.mrb[0].mxu0
    %v510 = vadd.f32 %v366, %v509
    %511 = vmatprep.mubr.f32.mxu0 0.0
    %v512 = vand.u32 %v51, 4294901760
    %v513 = vsub.f32 %v51, %v512
    %514 = vmatmul.mubr.f32.gmra.mrb[0].mxu0 %v513
    %v515 = vpop.f32.mrb[0].mxu0
    %v516 = vadd.f32 %v371, %v515
    %v517 = vpop.f32.mrb[0].mxu0
    %v518 = vadd.f32 %v373, %v517
    %519 = vdwg.mxu0
    %v520 = vand.u32 %v21, 4294901760
    %521 = vmatprep.subr.mxu0 %v520
    %v522 = vand.u32 %v20, 4294901760
    %523 = vmatpush1.msra.mxu0 %v522
    %v524 = vand.u32 %v23, 4294901760
    %525 = vmatprep.subr.mxu0 %v524
    %v526 = vand.u32 %v22, 4294901760
    %527 = vmatpush1.msra.mxu0 %v526
    %v528 = vand.u32 %v25, 4294901760
    %529 = vmatprep.subr.mxu0 %v528
    %v530 = vand.u32 %v24, 4294901760
    %531 = vmatpush1.msra.mxu0 %v530
    %v532 = vand.u32 %v27, 4294901760
    %533 = vmatprep.subr.mxu0 %v532
    %v534 = vand.u32 %v26, 4294901760
    %535 = vmatpush1.msra.mxu0 %v534
    %536 = vmatprep.subr.mxu0 0.0
    %537 = vmatpush1.msra.mxu0 0.0
    %538 = vmatprep.subr.mxu0 0.0
    %539 = vmatpush1.msra.mxu0 0.0
    %540 = vmatprep.subr.mxu0 0.0
    %541 = vmatpush1.msra.mxu0 0.0
    %542 = vmatprep.subr.mxu0 0.0
    %543 = vmatpush1.msra.mxu0 0.0
    %544 = vmatprep.subr.mxu0 0.0
    %545 = vmatpush1.msra.mxu0 0.0
    %546 = vmatprep.subr.mxu0 0.0
    %547 = vmatpush1.msra.mxu0 0.0
    %548 = vmatprep.subr.mxu0 0.0
    %549 = vmatpush1.msra.mxu0 0.0
    %550 = vmatprep.subr.mxu0 0.0
    %551 = vmatpush1.msra.mxu0 0.0
    %552 = vmatprep.subr.mxu0 0.0
    %553 = vmatpush1.msra.mxu0 0.0
    %554 = vmatprep.subr.mxu0 0.0
    %555 = vmatpush1.msra.mxu0 0.0
    %556 = vmatprep.subr.mxu0 0.0
    %557 = vmatpush1.msra.mxu0 0.0
    %558 = vmatprep.subr.mxu0 0.0
    %559 = vmatpush1.msra.mxu0 0.0
    %560 = vmatprep.subr.mxu0 0.0
    %561 = vmatpush1.msra.mxu0 0.0
    %562 = vmatprep.subr.mxu0 0.0
    %563 = vmatpush1.msra.mxu0 0.0
    %564 = vmatprep.subr.mxu0 0.0
    %565 = vmatpush1.msra.mxu0 0.0
    %566 = vmatprep.subr.mxu0 0.0
    %567 = vmatpush1.msra.mxu0 0.0
    %568 = vmatprep.subr.mxu0 0.0
    %569 = vmatpush1.msra.mxu0 0.0
    %570 = vmatprep.subr.mxu0 0.0
    %571 = vmatpush1.msra.mxu0 0.0
    %572 = vmatprep.subr.mxu0 0.0
    %573 = vmatpush1.msra.mxu0 0.0
    %574 = vmatprep.subr.mxu0 0.0
    %575 = vmatpush1.msra.mxu0 0.0
    %576 = vmatprep.subr.mxu0 0.0
    %577 = vmatpush1.msra.mxu0 0.0
    %578 = vmatprep.subr.mxu0 0.0
    %579 = vmatpush1.msra.mxu0 0.0
    %580 = vmatprep.subr.mxu0 0.0
    %581 = vmatpush1.msra.mxu0 0.0
    %582 = vmatprep.subr.mxu0 0.0
    %583 = vmatpush1.msra.mxu0 0.0
    %584 = vmatprep.subr.mxu0 0.0
    %585 = vmatpush1.msra.mxu0 0.0
    %586 = vmatprep.subr.mxu0 0.0
    %587 = vmatpush1.msra.mxu0 0.0
    %588 = vmatprep.subr.mxu0 0.0
    %589 = vmatpush1.msra.mxu0 0.0
    %590 = vmatprep.subr.mxu0 0.0
    %591 = vmatpush1.msra.mxu0 0.0
    %592 = vmatprep.mubr.f32.mxu0 0.0
    %v593 = vand.u32 %v30, 4294901760
    %v594 = vsub.f32 %v30, %v593
    %v595 = vand.u32 %v594, 4294901760
    %596 = vmatmul.mubr.f32.gmra.mrb[0].mxu0 %v595
    %v597 = vpop.f32.mrb[0].mxu0
    %v598 = vadd.f32 %v460, %v597
    %v599 = vpop.f32.mrb[0].mxu0
    %v600 = vadd.f32 %v462, %v599
    %601 = vmatprep.mubr.f32.mxu0 0.0
    %v602 = vand.u32 %v33, 4294901760
    %v603 = vsub.f32 %v33, %v602
    %v604 = vand.u32 %v603, 4294901760
    %605 = vmatmul.mubr.f32.gmra.mrb[0].mxu0 %v604
    %v606 = vpop.f32.mrb[0].mxu0
    %v607 = vadd.f32 %v468, %v606
    %v608 = vpop.f32.mrb[0].mxu0
    %v609 = vadd.f32 %v470, %v608
    %610 = vmatprep.mubr.f32.mxu0 0.0
    %v611 = vand.u32 %v36, 4294901760
    %v612 = vsub.f32 %v36, %v611
    %v613 = vand.u32 %v612, 4294901760
    %614 = vmatmul.mubr.f32.gmra.mrb[0].mxu0 %v613
    %v615 = vpop.f32.mrb[0].mxu0
    %v616 = vadd.f32 %v476, %v615
    %v617 = vpop.f32.mrb[0].mxu0
    %v618 = vadd.f32 %v478, %v617
    %619 = vmatprep.mubr.f32.mxu0 0.0
    %v620 = vand.u32 %v39, 4294901760
    %v621 = vsub.f32 %v39, %v620
    %v622 = vand.u32 %v621, 4294901760
    %623 = vmatmul.mubr.f32.gmra.mrb[0].mxu0 %v622
    %v624 = vpop.f32.mrb[0].mxu0
    %v625 = vadd.f32 %v484, %v624
    %v626 = vpop.f32.mrb[0].mxu0
    %v627 = vadd.f32 %v486, %v626
    %628 = vmatprep.mubr.f32.mxu0 0.0
    %v629 = vand.u32 %v42, 4294901760
    %v630 = vsub.f32 %v42, %v629
    %v631 = vand.u32 %v630, 4294901760
    %632 = vmatmul.mubr.f32.gmra.mrb[0].mxu0 %v631
    %v633 = vpop.f32.mrb[0].mxu0
    %v634 = vadd.f32 %v492, %v633
    %v635 = vpop.f32.mrb[0].mxu0
    %v636 = vadd.f32 %v494, %v635
    %637 = vmatprep.mubr.f32.mxu0 0.0
    %v638 = vand.u32 %v45, 4294901760
    %v639 = vsub.f32 %v45, %v638
    %v640 = vand.u32 %v639, 4294901760
    %641 = vmatmul.mubr.f32.gmra.mrb[0].mxu0 %v640
    %v642 = vpop.f32.mrb[0].mxu0
    %v643 = vadd.f32 %v500, %v642
    %v644 = vpop.f32.mrb[0].mxu0
    %v645 = vadd.f32 %v502, %v644
    %646 = vmatprep.mubr.f32.mxu0 0.0
    %v647 = vand.u32 %v48, 4294901760
    %v648 = vsub.f32 %v48, %v647
    %v649 = vand.u32 %v648, 4294901760
    %650 = vmatmul.mubr.f32.gmra.mrb[0].mxu0 %v649
    %v651 = vpop.f32.mrb[0].mxu0
    %v652 = vadd.f32 %v508, %v651
    %v653 = vpop.f32.mrb[0].mxu0
    %v654 = vadd.f32 %v510, %v653
    %655 = vmatprep.mubr.f32.mxu0 0.0
    %v656 = vand.u32 %v51, 4294901760
    %v657 = vsub.f32 %v51, %v656
    %v658 = vand.u32 %v657, 4294901760
    %659 = vmatmul.mubr.f32.gmra.mrb[0].mxu0 %v658
    %v660 = vpop.f32.mrb[0].mxu0
    %v661 = vadd.f32 %v516, %v660
    %v662 = vpop.f32.mrb[0].mxu0
    %v663 = vadd.f32 %v518, %v662
    %664 = vdwg.mxu0
    %v665 = vand.u32 %v21, 4294901760
    %v666 = vsub.f32 %v21, %v665
    %v667 = vand.u32 %v666, 4294901760
    %668 = vmatprep.subr.mxu0 %v667
    %v669 = vand.u32 %v20, 4294901760
    %v670 = vsub.f32 %v20, %v669
    %v671 = vand.u32 %v670, 4294901760
    %672 = vmatpush1.msra.mxu0 %v671
    %v673 = vand.u32 %v23, 4294901760
    %v674 = vsub.f32 %v23, %v673
    %v675 = vand.u32 %v674, 4294901760
    %676 = vmatprep.subr.mxu0 %v675
    %v677 = vand.u32 %v22, 4294901760
    %v678 = vsub.f32 %v22, %v677
    %v679 = vand.u32 %v678, 4294901760
    %680 = vmatpush1.msra.mxu0 %v679
    %v681 = vand.u32 %v25, 4294901760
    %v682 = vsub.f32 %v25, %v681
    %v683 = vand.u32 %v682, 4294901760
    %684 = vmatprep.subr.mxu0 %v683
    %v685 = vand.u32 %v24, 4294901760
    %v686 = vsub.f32 %v24, %v685
    %v687 = vand.u32 %v686, 4294901760
    %688 = vmatpush1.msra.mxu0 %v687
    %v689 = vand.u32 %v27, 4294901760
    %v690 = vsub.f32 %v27, %v689
    %v691 = vand.u32 %v690, 4294901760
    %692 = vmatprep.subr.mxu0 %v691
    %v693 = vand.u32 %v26, 4294901760
    %v694 = vsub.f32 %v26, %v693
    %v695 = vand.u32 %v694, 4294901760
    %696 = vmatpush1.msra.mxu0 %v695
    %697 = vmatprep.subr.mxu0 0.0
    %698 = vmatpush1.msra.mxu0 0.0
    %699 = vmatprep.subr.mxu0 0.0
    %700 = vmatpush1.msra.mxu0 0.0
    %701 = vmatprep.subr.mxu0 0.0
    %702 = vmatpush1.msra.mxu0 0.0
    %703 = vmatprep.subr.mxu0 0.0
    %704 = vmatpush1.msra.mxu0 0.0
    %705 = vmatprep.subr.mxu0 0.0
    %706 = vmatpush1.msra.mxu0 0.0
    %707 = vmatprep.subr.mxu0 0.0
    %708 = vmatpush1.msra.mxu0 0.0
    %709 = vmatprep.subr.mxu0 0.0
    %710 = vmatpush1.msra.mxu0 0.0
    %711 = vmatprep.subr.mxu0 0.0
    %712 = vmatpush1.msra.mxu0 0.0
    %713 = vmatprep.subr.mxu0 0.0
    %714 = vmatpush1.msra.mxu0 0.0
    %715 = vmatprep.subr.mxu0 0.0
    %716 = vmatpush1.msra.mxu0 0.0
    %717 = vmatprep.subr.mxu0 0.0
    %718 = vmatpush1.msra.mxu0 0.0
    %719 = vmatprep.subr.mxu0 0.0
    %720 = vmatpush1.msra.mxu0 0.0
    %721 = vmatprep.subr.mxu0 0.0
    %722 = vmatpush1.msra.mxu0 0.0
    %723 = vmatprep.subr.mxu0 0.0
    %724 = vmatpush1.msra.mxu0 0.0
    %725 = vmatprep.subr.mxu0 0.0
    %726 = vmatpush1.msra.mxu0 0.0
    %727 = vmatprep.subr.mxu0 0.0
    %728 = vmatpush1.msra.mxu0 0.0
    %729 = vmatprep.subr.mxu0 0.0
    %730 = vmatpush1.msra.mxu0 0.0
    %731 = vmatprep.subr.mxu0 0.0
    %732 = vmatpush1.msra.mxu0 0.0
    %733 = vmatprep.subr.mxu0 0.0
    %734 = vmatpush1.msra.mxu0 0.0
    %735 = vmatprep.subr.mxu0 0.0
    %736 = vmatpush1.msra.mxu0 0.0
    %737 = vmatprep.subr.mxu0 0.0
    %738 = vmatpush1.msra.mxu0 0.0
    %739 = vmatprep.subr.mxu0 0.0
    %740 = vmatpush1.msra.mxu0 0.0
    %741 = vmatprep.subr.mxu0 0.0
    %742 = vmatpush1.msra.mxu0 0.0
    %743 = vmatprep.subr.mxu0 0.0
    %744 = vmatpush1.msra.mxu0 0.0
    %745 = vmatprep.subr.mxu0 0.0
    %746 = vmatpush1.msra.mxu0 0.0
    %747 = vmatprep.subr.mxu0 0.0
    %748 = vmatpush1.msra.mxu0 0.0
    %749 = vmatprep.subr.mxu0 0.0
    %750 = vmatpush1.msra.mxu0 0.0
    %751 = vmatprep.subr.mxu0 0.0
    %752 = vmatpush1.msra.mxu0 0.0
    %753 = vmatprep.mubr.f32.mxu0 0.0
    %v754 = vand.u32 %v30, 4294901760
    %755 = vmatmul.mubr.f32.gmra.mrb[0].mxu0 %v754
    %v756 = vpop.f32.mrb[0].mxu0
    %v757 = vadd.f32 %v598, %v756
    %v758 = vpop.f32.mrb[0].mxu0
    %v759 = vadd.f32 %v600, %v758
    %760 = vmatprep.mubr.f32.mxu0 0.0
    %v761 = vand.u32 %v33, 4294901760
    %762 = vmatmul.mubr.f32.gmra.mrb[0].mxu0 %v761
    %v763 = vpop.f32.mrb[0].mxu0
    %v764 = vadd.f32 %v607, %v763
    %v765 = vpop.f32.mrb[0].mxu0
    %v766 = vadd.f32 %v609, %v765
    %767 = vmatprep.mubr.f32.mxu0 0.0
    %v768 = vand.u32 %v36, 4294901760
    %769 = vmatmul.mubr.f32.gmra.mrb[0].mxu0 %v768
    %v770 = vpop.f32.mrb[0].mxu0
    %v771 = vadd.f32 %v616, %v770
    %v772 = vpop.f32.mrb[0].mxu0
    %v773 = vadd.f32 %v618, %v772
    %774 = vmatprep.mubr.f32.mxu0 0.0
    %v775 = vand.u32 %v39, 4294901760
    %776 = vmatmul.mubr.f32.gmra.mrb[0].mxu0 %v775
    %v777 = vpop.f32.mrb[0].mxu0
    %v778 = vadd.f32 %v625, %v777
    %v779 = vpop.f32.mrb[0].mxu0
    %v780 = vadd.f32 %v627, %v779
    %781 = vmatprep.mubr.f32.mxu0 0.0
    %v782 = vand.u32 %v42, 4294901760
    %783 = vmatmul.mubr.f32.gmra.mrb[0].mxu0 %v782
    %v784 = vpop.f32.mrb[0].mxu0
    %v785 = vadd.f32 %v634, %v784
    %v786 = vpop.f32.mrb[0].mxu0
    %v787 = vadd.f32 %v636, %v786
    %788 = vmatprep.mubr.f32.mxu0 0.0
    %v789 = vand.u32 %v45, 4294901760
    %790 = vmatmul.mubr.f32.gmra.mrb[0].mxu0 %v789
    %v791 = vpop.f32.mrb[0].mxu0
    %v792 = vadd.f32 %v643, %v791
    %v793 = vpop.f32.mrb[0].mxu0
    %v794 = vadd.f32 %v645, %v793
    %795 = vmatprep.mubr.f32.mxu0 0.0
    %v796 = vand.u32 %v48, 4294901760
    %797 = vmatmul.mubr.f32.gmra.mrb[0].mxu0 %v796
    %v798 = vpop.f32.mrb[0].mxu0
    %v799 = vadd.f32 %v652, %v798
    %v800 = vpop.f32.mrb[0].mxu0
    %v801 = vadd.f32 %v654, %v800
    %802 = vmatprep.mubr.f32.mxu0 0.0
    %v803 = vand.u32 %v51, 4294901760
    %804 = vmatmul.mubr.f32.gmra.mrb[0].mxu0 %v803
    %v805 = vpop.f32.mrb[0].mxu0
    %v806 = vadd.f32 %v661, %v805
    %v807 = vpop.f32.mrb[0].mxu0
    %v808 = vadd.f32 %v663, %v807
    %809 = vdwg.mxu0
    %v810 = vand.u32 %v21, 4294901760
    %811 = vmatprep.subr.mxu0 %v810
    %v812 = vand.u32 %v20, 4294901760
    %813 = vmatpush1.msra.mxu0 %v812
    %v814 = vand.u32 %v23, 4294901760
    %815 = vmatprep.subr.mxu0 %v814
    %v816 = vand.u32 %v22, 4294901760
    %817 = vmatpush1.msra.mxu0 %v816
    %v818 = vand.u32 %v25, 4294901760
    %819 = vmatprep.subr.mxu0 %v818
    %v820 = vand.u32 %v24, 4294901760
    %821 = vmatpush1.msra.mxu0 %v820
    %v822 = vand.u32 %v27, 4294901760
    %823 = vmatprep.subr.mxu0 %v822
    %v824 = vand.u32 %v26, 4294901760
    %825 = vmatpush1.msra.mxu0 %v824
    %826 = vmatprep.subr.mxu0 0.0
    %827 = vmatpush1.msra.mxu0 0.0
    %828 = vmatprep.subr.mxu0 0.0
    %829 = vmatpush1.msra.mxu0 0.0
    %830 = vmatprep.subr.mxu0 0.0
    %831 = vmatpush1.msra.mxu0 0.0
    %832 = vmatprep.subr.mxu0 0.0
    %833 = vmatpush1.msra.mxu0 0.0
    %834 = vmatprep.subr.mxu0 0.0
    %835 = vmatpush1.msra.mxu0 0.0
    %836 = vmatprep.subr.mxu0 0.0
    %837 = vmatpush1.msra.mxu0 0.0
    %838 = vmatprep.subr.mxu0 0.0
    %839 = vmatpush1.msra.mxu0 0.0
    %840 = vmatprep.subr.mxu0 0.0
    %841 = vmatpush1.msra.mxu0 0.0
    %842 = vmatprep.subr.mxu0 0.0
    %843 = vmatpush1.msra.mxu0 0.0
    %844 = vmatprep.subr.mxu0 0.0
    %845 = vmatpush1.msra.mxu0 0.0
    %846 = vmatprep.subr.mxu0 0.0
    %847 = vmatpush1.msra.mxu0 0.0
    %848 = vmatprep.subr.mxu0 0.0
    %849 = vmatpush1.msra.mxu0 0.0
    %850 = vmatprep.subr.mxu0 0.0
    %851 = vmatpush1.msra.mxu0 0.0
    %852 = vmatprep.subr.mxu0 0.0
    %853 = vmatpush1.msra.mxu0 0.0
    %854 = vmatprep.subr.mxu0 0.0
    %855 = vmatpush1.msra.mxu0 0.0
    %856 = vmatprep.subr.mxu0 0.0
    %857 = vmatpush1.msra.mxu0 0.0
    %858 = vmatprep.subr.mxu0 0.0
    %859 = vmatpush1.msra.mxu0 0.0
    %860 = vmatprep.subr.mxu0 0.0
    %861 = vmatpush1.msra.mxu0 0.0
    %862 = vmatprep.subr.mxu0 0.0
    %863 = vmatpush1.msra.mxu0 0.0
    %864 = vmatprep.subr.mxu0 0.0
    %865 = vmatpush1.msra.mxu0 0.0
    %866 = vmatprep.subr.mxu0 0.0
    %867 = vmatpush1.msra.mxu0 0.0
    %868 = vmatprep.subr.mxu0 0.0
    %869 = vmatpush1.msra.mxu0 0.0
    %870 = vmatprep.subr.mxu0 0.0
    %871 = vmatpush1.msra.mxu0 0.0
    %872 = vmatprep.subr.mxu0 0.0
    %873 = vmatpush1.msra.mxu0 0.0
    %874 = vmatprep.subr.mxu0 0.0
    %875 = vmatpush1.msra.mxu0 0.0
    %876 = vmatprep.subr.mxu0 0.0
    %877 = vmatpush1.msra.mxu0 0.0
    %878 = vmatprep.subr.mxu0 0.0
    %879 = vmatpush1.msra.mxu0 0.0
    %880 = vmatprep.subr.mxu0 0.0
    %881 = vmatpush1.msra.mxu0 0.0
    %882 = vmatprep.mubr.f32.mxu0 0.0
    %v883 = vand.u32 %v30, 4294901760
    %884 = vmatmul.mubr.f32.gmra.mrb[0].mxu0 %v883
    %v885 = vpop.f32.mrb[0].mxu0
    %v886 = vadd.f32 %v757, %v885
    %v887 = vpop.f32.mrb[0].mxu0
    %v888 = vadd.f32 %v759, %v887
    %889 = vmatprep.mubr.f32.mxu0 0.0
    %v890 = vand.u32 %v33, 4294901760
    %891 = vmatmul.mubr.f32.gmra.mrb[0].mxu0 %v890
    %v892 = vpop.f32.mrb[0].mxu0
    %v893 = vadd.f32 %v764, %v892
    %v894 = vpop.f32.mrb[0].mxu0
    %v895 = vadd.f32 %v766, %v894
    %896 = vmatprep.mubr.f32.mxu0 0.0
    %v897 = vand.u32 %v36, 4294901760
    %898 = vmatmul.mubr.f32.gmra.mrb[0].mxu0 %v897
    %v899 = vpop.f32.mrb[0].mxu0
    %v900 = vadd.f32 %v771, %v899
    %v901 = vpop.f32.mrb[0].mxu0
    %v902 = vadd.f32 %v773, %v901
    %903 = vmatprep.mubr.f32.mxu0 0.0
    %v904 = vand.u32 %v39, 4294901760
    %905 = vmatmul.mubr.f32.gmra.mrb[0].mxu0 %v904
    %v906 = vpop.f32.mrb[0].mxu0
    %v907 = vadd.f32 %v778, %v906
    %v908 = vpop.f32.mrb[0].mxu0
    %v909 = vadd.f32 %v780, %v908
    %910 = vmatprep.mubr.f32.mxu0 0.0
    %v911 = vand.u32 %v42, 4294901760
    %912 = vmatmul.mubr.f32.gmra.mrb[0].mxu0 %v911
    %v913 = vpop.f32.mrb[0].mxu0
    %v914 = vadd.f32 %v785, %v913
    %v915 = vpop.f32.mrb[0].mxu0
    %v916 = vadd.f32 %v787, %v915
    %917 = vmatprep.mubr.f32.mxu0 0.0
    %v918 = vand.u32 %v45, 4294901760
    %919 = vmatmul.mubr.f32.gmra.mrb[0].mxu0 %v918
    %v920 = vpop.f32.mrb[0].mxu0
    %v921 = vadd.f32 %v792, %v920
    %v922 = vpop.f32.mrb[0].mxu0
    %v923 = vadd.f32 %v794, %v922
    %924 = vmatprep.mubr.f32.mxu0 0.0
    %v925 = vand.u32 %v48, 4294901760
    %926 = vmatmul.mubr.f32.gmra.mrb[0].mxu0 %v925
    %v927 = vpop.f32.mrb[0].mxu0
    %v928 = vadd.f32 %v799, %v927
    %v929 = vpop.f32.mrb[0].mxu0
    %v930 = vadd.f32 %v801, %v929
    %931 = vmatprep.mubr.f32.mxu0 0.0
    %v932 = vand.u32 %v51, 4294901760
    %933 = vmatmul.mubr.f32.gmra.mrb[0].mxu0 %v932
    %v934 = vpop.f32.mrb[0].mxu0
    %v935 = vadd.f32 %v806, %v934
    %v936 = vpop.f32.mrb[0].mxu0
    %v937 = vadd.f32 %v808, %v936
    %938 = vdwg.mxu0
    %939 = vst [vmem:[#allocation2] sm:$0xff] %v886
    %940 = vst [vmem:[#allocation2 + $0x8] sm:$0xff] %v888
    %941 = vst [vmem:[#allocation2 + $0x10] sm:$0xff] %v893
    %942 = vst [vmem:[#allocation2 + $0x18] sm:$0xff] %v895
    %943 = vst [vmem:[#allocation2 + $0x20] sm:$0xff] %v900
    %944 = vst [vmem:[#allocation2 + $0x28] sm:$0xff] %v902
    %945 = vst [vmem:[#allocation2 + $0x30] sm:$0xff] %v907
    %946 = vst [vmem:[#allocation2 + $0x38] sm:$0xff] %v909
    %947 = vst [vmem:[#allocation2 + $0x40] sm:$0xff] %v914
    %948 = vst [vmem:[#allocation2 + $0x48] sm:$0xff] %v916
    %949 = vst [vmem:[#allocation2 + $0x50] sm:$0xff] %v921
    %950 = vst [vmem:[#allocation2 + $0x58] sm:$0xff] %v923
    %951 = vst [vmem:[#allocation2 + $0x60] sm:$0xff] %v928
    %952 = vst [vmem:[#allocation2 + $0x68] sm:$0xff] %v930
    %953 = vst [vmem:[#allocation2 + $0x70] sm:$0xff] %v935
    %954 = vst [vmem:[#allocation2 + $0x78] sm:$0xff] %v937
    // Predicated region
    $region10: #{tpu_custom_call.1} parent=1 // pred_check
      _
    $region11: #{tpu_custom_call.1} parent=1 // pred_check_branch
      %956 = sbr.rel (0) target = $region13
    $region12: #{tpu_custom_call.1} parent=1 // pred_region
      %s958 = ssub.s32 2048, 2048
      %959 = vsyncadd [#allocation3], %s958
      %s960 = sshll.u32 [#allocation2], 4
      %s961 = int_to_ptr.vmem [resolvable:$true] %s960
      %966 = dma.vmem_to_hbm [thread:$0]  %s961, 2048, %s2, [#allocation3], 256, 256, 16
    $region13: #{tpu_custom_call.1} parent=1 // pred_fallthru
      _
    // Predicated region
    $region14: #{tpu_custom_call.1} parent=1 // pred_check
      _
    $region15: #{tpu_custom_call.1} parent=1 // pred_check_branch
      %968 = sbr.rel (0) target = $region17
    $region16: #{tpu_custom_call.1} parent=1 // pred_region
      %969 = dma.done [#allocation3], 2048
    $region17: #{tpu_custom_call.1} parent=1 // pred_fallthru
      _
    %970 = vsyncpa [#allocation3], 1

</llo_original>
